<compile_context>
chip_gen: v7x
topology: tpu7x:2x2x1
jax: 0.10.0
libtpu: 0.0.40
codegen_flags: <defaults>
</compile_context>

<pallas_src>
import functools
import math
import re

import jax
import jax.numpy as jnp
from jax.experimental import pallas as pl
from jax.experimental.pallas import tpu as pltpu


def _round_up(n, m):
    return ((n + m - 1) // m) * m


def _choose_tb(B, tb):
    """Batch tile: multiple of 128 (lane width); keep >=2 grid steps for v7x."""
    full = _round_up(B, 128)
    tb = max(128, _round_up(tb, 128))
    if full <= 128:
        return full  # single tile; nothing to split across cores
    half = _round_up(pl.cdiv(B, 2), 128)
    return min(tb, max(half, 128))


def _bf16_activations_supported():
    """True on v6e/v7x (bf16-native VPU/EUP); False on v5e and older/unknown."""
    try:
        kind = jax.devices()[0].device_kind
    except Exception:
        return False
    m = re.search(r"(\d+)", kind)
    if not m:
        return False
    return int(m.group(1)) >= 6


def mlp_kernel(x_ref, w1_ref, b1_ref, w2_ref, b2_ref, w3_ref, b3_ref, o_ref,
               *, bf16_act):
    # x_ref: (2, TB) f32 -- features on sublanes (2 -> 8 pad), batch on lanes.
    x0 = x_ref[0:1, :]          # (1, TB), sublane-broadcast when multiplied
    x1 = x_ref[1:2, :]

    # Layer 1: K=2 contraction on the VPU (two broadcast FMAs).
    z1 = w1_ref[:, 0:1] * x0 + w1_ref[:, 1:2] * x1 + b1_ref[...]   # (64, TB) f32
    if bf16_act:
        h1 = jnp.tanh(z1.astype(jnp.bfloat16))                     # bf16 EUP
    else:
        h1 = jnp.tanh(z1).astype(jnp.bfloat16)                     # f32 EUP (v5e)

    # Layer 2: (64, 64) @ (64, TB) on the MXU, bf16 x bf16 -> f32 accumulate.
    z2 = jnp.dot(w2_ref[...], h1, preferred_element_type=jnp.float32) + b2_ref[...]
    if bf16_act:
        h2 = jnp.tanh(z2.astype(jnp.bfloat16))
    else:
        h2 = jnp.tanh(z2).astype(jnp.bfloat16)

    # Layer 3: (3, 64) @ (64, TB) on the MXU; lane-dense (3, TB) output block.
    o = jnp.dot(w3_ref[...], h2, preferred_element_type=jnp.float32) + b3_ref[...]
    o_ref[...] = o.astype(o_ref.dtype)


def simple_net_forward(x, params, *, tb=2048):
    """x: (B, 2) f32 -> (B, 3) f32, matching the PyTorch module's forward."""
    (w1, b1, w2, b2, w3, b3) = params   # torch-layout: W (out, in), b (out, 1)
    B, F = x.shape
    out_dim = w3.shape[0]

    TB = _choose_tb(B, tb)
    Bp = _round_up(B, TB)
    grid = (Bp // TB,)

    # Batch-on-lanes layout + zero-pad to a TB multiple (dense tiles, no ragged
    # last block).  One streaming XLA transpose each way is far cheaper than
    # in-kernel masked stores / strided writeback DMAs.
    xt = jnp.pad(x.T, ((0, 0), (0, Bp - B)))            # (2, Bp)

    # Cast MXU operands once in the wrapper (f32 master copies kept by caller).
    w2_bf = w2.astype(jnp.bfloat16)
    w3_bf = w3.astype(jnp.bfloat16)

    bf16_act = _bf16_activations_supported()

    out_t = pl.pallas_call(
        functools.partial(mlp_kernel, bf16_act=bf16_act),
        out_shape=jax.ShapeDtypeStruct((out_dim, Bp), jnp.float32),
        grid_spec=pltpu.PrefetchScalarGridSpec(
            num_scalar_prefetch=0,
            grid=grid,
            in_specs=[
                # x: tiled over the batch (lane) axis.
                pl.BlockSpec((F, TB), lambda i: (0, i)),
                # Weights / biases: full-array blocks with constant index_maps
                # -> resident in VMEM across all grid steps (no re-DMA).
                pl.BlockSpec(w1.shape, lambda i: (0, 0)),
                pl.BlockSpec(b1.shape, lambda i: (0, 0)),
                pl.BlockSpec(w2.shape, lambda i: (0, 0)),
                pl.BlockSpec(b2.shape, lambda i: (0, 0)),
                pl.BlockSpec(w3.shape, lambda i: (0, 0)),
                pl.BlockSpec(b3.shape, lambda i: (0, 0)),
            ],
            out_specs=pl.BlockSpec((out_dim, TB), lambda i: (0, i)),
        ),
        compiler_params=pltpu.CompilerParams(
            dimension_semantics=("parallel",)),
    )(xt, w1, b1, w2_bf, b2, w3_bf, b3)

    # Preserve the module's (B, 3) interface with one cheap wrapper transpose.
    return out_t[:, :B].T


# ---------------------------------------------------------------------------
# Parameter init (matches the PyTorch module) and references.
# ---------------------------------------------------------------------------

def xavier_uniform(key, fan_out, fan_in):
    # torch.nn.init.xavier_uniform_ on a (out, in) Linear weight.
    limit = math.sqrt(6.0 / (fan_in + fan_out))
    return jax.random.uniform(key, (fan_out, fan_in), jnp.float32, -limit, limit)


def linear_bias(key, fan_in, fan_out):
    # Default torch.nn.Linear bias init: U(-1/sqrt(fan_in), 1/sqrt(fan_in)).
    bound = 1.0 / math.sqrt(fan_in)
    return jax.random.uniform(key, (fan_out, 1), jnp.float32, -bound, bound)


def init_params(key):
    k = jax.random.split(key, 6)
    w1 = xavier_uniform(k[0], 64, 2)
    b1 = linear_bias(k[1], 2, 64)
    w2 = xavier_uniform(k[2], 64, 64)
    b2 = linear_bias(k[3], 64, 64)
    w3 = xavier_uniform(k[4], 3, 64)
    b3 = linear_bias(k[5], 64, 3)
    return (w1, b1, w2, b2, w3, b3)


def reference_forward_f32(x, params):
    # Pure f32 reference (the PyTorch module's numerics).
    (w1, b1, w2, b2, w3, b3) = params
    h = jnp.tanh(w1 @ x.T + b1)
    h = jnp.tanh(w2 @ h + b2)
    return (w3 @ h + b3).T


def reference_forward_matched(x, params, bf16_act):
    # Matches the kernel's mixed-precision recipe exactly (bf16 MXU inputs,
    # f32 accumulate, generation-dependent activation precision).
    (w1, b1, w2, b2, w3, b3) = params
    xt = x.T
    z1 = w1[:, 0:1] * xt[0:1, :] + w1[:, 1:2] * xt[1:2, :] + b1
    h1 = jnp.tanh(z1.astype(jnp.bfloat16)) if bf16_act else jnp.tanh(z1).astype(jnp.bfloat16)
    z2 = jnp.dot(w2.astype(jnp.bfloat16), h1, preferred_element_type=jnp.float32) + b2
    h2 = jnp.tanh(z2.astype(jnp.bfloat16)) if bf16_act else jnp.tanh(z2).astype(jnp.bfloat16)
    o = jnp.dot(w3.astype(jnp.bfloat16), h2, preferred_element_type=jnp.float32) + b3
    return o.T


if __name__ == "__main__":
    key = jax.random.PRNGKey(0)
    pkey, xkey = jax.random.split(key)
    params = init_params(pkey)

    # B deliberately NOT a multiple of 128: exercises the pad-and-slice ragged
    # path.  TB resolves to 256 -> Bp=512, 2 grid steps (both v7x cores busy).
    B = 300
    x = jax.random.normal(xkey, (B, 2), jnp.float32)

    bf16_act = _bf16_activations_supported()

    out = simple_net_forward(x, params)
    jax.block_until_ready(out)
    assert out.shape == (B, 3)

    # Tight check vs. a reference using the exact same mixed-precision recipe
    # as the kernel (looser when activations run in bf16: hardware EUP tanh and
    # XLA's bf16 tanh may differ by a few bf16 ulps).
    ref_matched = reference_forward_matched(x, params, bf16_act)
    tol = 3e-2 if bf16_act else 1e-4
    assert jnp.allclose(out, ref_matched, atol=tol, rtol=tol), "matched-recipe check failed"

    # Loose check vs. the pure-f32 PyTorch-equivalent forward (bf16 rounding in
    # layers 2/3 and, on v6e/v7x, bf16 activations bound the difference).
    ref_f32 = reference_forward_f32(x, params)
    assert jnp.allclose(out, ref_f32, atol=1e-1, rtol=1e-1), "f32-reference check failed"

    print("KERNEL_OK")
</pallas_src>

<mosaic_0001>
module attributes {stable_mosaic.version = 11 : i64} {
  func.func @mlp_kernel(%arg0: i32, %arg1: memref<2x256xf32, #tpu.memory_space<vmem>>, %arg2: memref<64x2xf32, #tpu.memory_space<vmem>>, %arg3: memref<64x1xf32, #tpu.memory_space<vmem>>, %arg4: memref<64x64xbf16, #tpu.memory_space<vmem>>, %arg5: memref<64x1xf32, #tpu.memory_space<vmem>>, %arg6: memref<3x64xbf16, #tpu.memory_space<vmem>>, %arg7: memref<3x1xf32, #tpu.memory_space<vmem>>, %arg8: memref<3x256xf32, #tpu.memory_space<vmem>>) attributes {dimension_semantics = [#tpu.dimension_semantics<parallel>], iteration_bounds = array<i64: 2>, scalar_prefetch = 0 : i64, scratch_operands = 0 : i64, tpu.core_type = #tpu.core_type<tc>, window_params = [{transform_indices = @transform_0, window_bounds = array<i64: 2, 256>}, {pipeline_mode = #tpu.pipeline_mode<synchronous>, transform_indices = @transform_1, window_bounds = array<i64: 64, 2>}, {pipeline_mode = #tpu.pipeline_mode<synchronous>, transform_indices = @transform_2, window_bounds = array<i64: 64, 1>}, {pipeline_mode = #tpu.pipeline_mode<synchronous>, transform_indices = @transform_3, window_bounds = array<i64: 64, 64>}, {pipeline_mode = #tpu.pipeline_mode<synchronous>, transform_indices = @transform_4, window_bounds = array<i64: 64, 1>}, {pipeline_mode = #tpu.pipeline_mode<synchronous>, transform_indices = @transform_5, window_bounds = array<i64: 3, 64>}, {pipeline_mode = #tpu.pipeline_mode<synchronous>, transform_indices = @transform_6, window_bounds = array<i64: 3, 1>}, {transform_indices = @transform_7, window_bounds = array<i64: 3, 256>}]} {
    %c0 = arith.constant 0 : index
    %c0_0 = arith.constant 0 : index
    %0 = vector.load %arg1[%c0, %c0_0] : memref<2x256xf32, #tpu.memory_space<vmem>>, vector<1x256xf32>
    %c1 = arith.constant 1 : index
    %c0_1 = arith.constant 0 : index
    %1 = vector.load %arg1[%c1, %c0_1] : memref<2x256xf32, #tpu.memory_space<vmem>>, vector<1x256xf32>
    %c0_2 = arith.constant 0 : index
    %c0_3 = arith.constant 0 : index
    %2 = vector.load %arg2[%c0_2, %c0_3] : memref<64x2xf32, #tpu.memory_space<vmem>>, vector<64x1xf32>
    %3 = vector.broadcast %2 : vector<64x1xf32> to vector<64x256xf32>
    %4 = vector.broadcast %0 : vector<1x256xf32> to vector<64x256xf32>
    %5 = arith.mulf %3, %4 : vector<64x256xf32>
    %c0_4 = arith.constant 0 : index
    %c1_5 = arith.constant 1 : index
    %6 = vector.load %arg2[%c0_4, %c1_5] : memref<64x2xf32, #tpu.memory_space<vmem>>, vector<64x1xf32>
    %7 = vector.broadcast %6 : vector<64x1xf32> to vector<64x256xf32>
    %8 = vector.broadcast %1 : vector<1x256xf32> to vector<64x256xf32>
    %9 = arith.mulf %7, %8 : vector<64x256xf32>
    %10 = arith.addf %5, %9 : vector<64x256xf32>
    %c0_6 = arith.constant 0 : index
    %c0_7 = arith.constant 0 : index
    %11 = vector.load %arg3[%c0_6, %c0_7] : memref<64x1xf32, #tpu.memory_space<vmem>>, vector<64x1xf32>
    %12 = vector.broadcast %11 : vector<64x1xf32> to vector<64x256xf32>
    %13 = arith.addf %10, %12 : vector<64x256xf32>
    %14 = math.tanh %13 : vector<64x256xf32>
    %15 = arith.truncf %14 : vector<64x256xf32> to vector<64x256xbf16>
    %c0_8 = arith.constant 0 : index
    %c0_9 = arith.constant 0 : index
    %16 = vector.load %arg4[%c0_8, %c0_9] : memref<64x64xbf16, #tpu.memory_space<vmem>>, vector<64x64xbf16>
    %cst = arith.constant dense<0.000000e+00> : vector<64x256xf32>
    %17 = tpu.matmul %16, %15, %cst {dimension_numbers = #tpu.dot_dimension_numbers<[1], [0], [0], [1], [0, 0, 1, 1], [], []>} : vector<64x64xbf16>, vector<64x256xbf16>, vector<64x256xf32> -> vector<64x256xf32>
    %c0_10 = arith.constant 0 : index
    %c0_11 = arith.constant 0 : index
    %18 = vector.load %arg5[%c0_10, %c0_11] : memref<64x1xf32, #tpu.memory_space<vmem>>, vector<64x1xf32>
    %19 = vector.broadcast %18 : vector<64x1xf32> to vector<64x256xf32>
    %20 = arith.addf %17, %19 : vector<64x256xf32>
    %21 = math.tanh %20 : vector<64x256xf32>
    %22 = arith.truncf %21 : vector<64x256xf32> to vector<64x256xbf16>
    %c0_12 = arith.constant 0 : index
    %c0_13 = arith.constant 0 : index
    %23 = vector.load %arg6[%c0_12, %c0_13] : memref<3x64xbf16, #tpu.memory_space<vmem>>, vector<3x64xbf16>
    %cst_14 = arith.constant dense<0.000000e+00> : vector<3x256xf32>
    %24 = tpu.matmul %23, %22, %cst_14 {dimension_numbers = #tpu.dot_dimension_numbers<[1], [0], [0], [1], [0, 0, 1, 1], [], []>} : vector<3x64xbf16>, vector<64x256xbf16>, vector<3x256xf32> -> vector<3x256xf32>
    %c0_15 = arith.constant 0 : index
    %c0_16 = arith.constant 0 : index
    %25 = vector.load %arg7[%c0_15, %c0_16] : memref<3x1xf32, #tpu.memory_space<vmem>>, vector<3x1xf32>
    %26 = vector.broadcast %25 : vector<3x1xf32> to vector<3x256xf32>
    %27 = arith.addf %24, %26 : vector<3x256xf32>
    %c0_17 = arith.constant 0 : index
    %c0_18 = arith.constant 0 : index
    %28 = vector.load %arg8[%c0_17, %c0_18] : memref<3x256xf32, #tpu.memory_space<vmem>>, vector<3x256xf32>
    tpu.vector_store %arg8[%c0_17, %c0_18], %27 {strides = array<i32>} : memref<3x256xf32, #tpu.memory_space<vmem>>, vector<3x256xf32>,
    return
  }
  func.func @transform_0(%arg0: i32) -> (i32, i32) {
    %c0_i32 = arith.constant 0 : i32
    %c0_i32_0 = arith.constant 0 : i32
    return %c0_i32, %arg0 : i32, i32
  }
  func.func @transform_1(%arg0: i32) -> (i32, i32) {
    %c0_i32 = arith.constant 0 : i32
    %c0_i32_0 = arith.constant 0 : i32
    %c0_i32_1 = arith.constant 0 : i32
    return %c0_i32, %c0_i32_0 : i32, i32
  }
  func.func @transform_2(%arg0: i32) -> (i32, i32) {
    %c0_i32 = arith.constant 0 : i32
    %c0_i32_0 = arith.constant 0 : i32
    %c0_i32_1 = arith.constant 0 : i32
    return %c0_i32, %c0_i32_0 : i32, i32
  }
  func.func @transform_3(%arg0: i32) -> (i32, i32) {
    %c0_i32 = arith.constant 0 : i32
    %c0_i32_0 = arith.constant 0 : i32
    %c0_i32_1 = arith.constant 0 : i32
    return %c0_i32, %c0_i32_0 : i32, i32
  }
  func.func @transform_4(%arg0: i32) -> (i32, i32) {
    %c0_i32 = arith.constant 0 : i32
    %c0_i32_0 = arith.constant 0 : i32
    %c0_i32_1 = arith.constant 0 : i32
    return %c0_i32, %c0_i32_0 : i32, i32
  }
  func.func @transform_5(%arg0: i32) -> (i32, i32) {
    %c0_i32 = arith.constant 0 : i32
    %c0_i32_0 = arith.constant 0 : i32
    %c0_i32_1 = arith.constant 0 : i32
    return %c0_i32, %c0_i32_0 : i32, i32
  }
  func.func @transform_6(%arg0: i32) -> (i32, i32) {
    %c0_i32 = arith.constant 0 : i32
    %c0_i32_0 = arith.constant 0 : i32
    %c0_i32_1 = arith.constant 0 : i32
    return %c0_i32, %c0_i32_0 : i32, i32
  }
  func.func @transform_7(%arg0: i32) -> (i32, i32) {
    %c0_i32 = arith.constant 0 : i32
    %c0_i32_0 = arith.constant 0 : i32
    return %c0_i32, %arg0 : i32, i32
  }
}

</mosaic_0001>

<llo_original>
// kernel: tpu_custom_call.1
$region0: #{tpu_custom_call.1}
  #allocation0 [shape = 'u32[]', space=smem, size = 0x4, offset = 0x4, fixed_abs, tag = 'smem constant byte address 0x4 - core index']
  #allocation1 [shape = 'u32[144,128]{1,0:T(1,128)}', space=vmem, size = 0x12000, scoped, tag = 'internal scratch']
  %s0 = inlined_call_operand.vmem [shape: f32[2,512], index: 0, kind: input, shape index: {}]
  %s1 = inlined_call_operand.vmem [shape: f32[64,2], index: 1, kind: input, shape index: {}]
  %s2 = inlined_call_operand.vmem [shape: f32[64,1], index: 2, kind: input, shape index: {}]
  %s3 = inlined_call_operand.vmem [shape: bf16[64,64], index: 3, kind: input, shape index: {}]
  %s4 = inlined_call_operand.vmem [shape: f32[64,1], index: 4, kind: input, shape index: {}]
  %s5 = inlined_call_operand.vmem [shape: bf16[3,64], index: 5, kind: input, shape index: {}]
  %s6 = inlined_call_operand.vmem [shape: f32[3,1], index: 6, kind: input, shape index: {}]
  %s7 = inlined_call_operand.hbm [shape: f32[3,512], index: 7, kind: output, shape index: {}]
  %s8 = sld [smem:[#allocation0]]
  $region61: #{tpu_custom_call.1} parent=0
    _
  %s10 = ssub.s32 1, %s8
  %s11 = scalar_select 0, %s10, %s8
  $region1: #{tpu_custom_call.1} parent=0
    #allocation2 [shape = 'u8[8192]{0}', space=vmem, size = 0x2000, scoped, tag = 'output window, operand 0']
    #allocation3 [shape = 's32[2]{0}', space=sflag, size = 0x8, scoped, tag = 'scoped memory for tpu_custom_call.1']
    %12 = vsyncpa [#allocation3], 0
    %s13 = scalar_lea.sflag [#allocation3], 1
    %14 = vsyncpa %s13, 0
    loop: start=0, step=1, limit=4
    $region2: #{tpu_custom_call.1} parent=1 // loop_pre_header
      _
    $region3: #{tpu_custom_call.1} parent=1 // loop_header
      %s16 = sphi 0, %s20
      %p17 = scmp.ge.s32.totalorder %s16, 4
      %s26 = sphi 0, %s28
      %s29 = sphi 0, %s26
      %s30 = sphi 0, %s29
      %s46 = sphi 0, %s30
      %s50 = sphi 0, %s50
      %s52 = sphi 0, %s50
      %s53 = sphi 0, %s52
      %s67 = sphi 0, %s53
      %s71 = sphi 0, %s71
      %s73 = sphi 0, %s71
      %s74 = sphi 0, %s73
      %s88 = sphi 0, %s74
      %s92 = sphi 0, %s92
      %s94 = sphi 0, %s92
      %s95 = sphi 0, %s94
      %s109 = sphi 0, %s95
      %s113 = sphi 0, %s113
      %s115 = sphi 0, %s113
      %s116 = sphi 0, %s115
      %s130 = sphi 0, %s116
      %s134 = sphi 0, %s134
      %s136 = sphi 0, %s134
      %s137 = sphi 0, %s136
      %s151 = sphi 0, %s137
      %s155 = sphi 0, %s155
      %s157 = sphi 0, %s155
      %s158 = sphi 0, %s157
      %s172 = sphi 0, %s158
      %s178 = sphi 0, %s180
      %s181 = sphi 0, %s178
      %s182 = sphi 0, %s181
      %s198 = sphi 0, %s182
    $region4: #{tpu_custom_call.1} parent=1 // loop_header_branch
      %19 = sbr.rel (%p17) target = $region8
    $region5: #{tpu_custom_call.1} parent=1 // loop_body
      %s21 = ssub.s32 %s16, 1
      %s22 = ssub.s32 %s16, 2
      %s23 = sadd.s32 %s16, 1
      %s24 = ssub.s32 %s16, %s23
      %p25 = scmp.eq.s32.totalorder %s24, 0
      %s27 = sadd.s32 %s26, 1
      %s28 = scalar_select %p25, %s26, %s27
      %p31 = pneg %p25
      %p32 = scmp.eq.s32.totalorder %s16, 1
      %p33 = por %p31, %p32
      %p34 = scmp.ne.s32.totalorder %s26, %s29
      %p35 = scmp.eq.s32.totalorder %s16, 0
      %p36 = por %p34, %p35
      %p37 = scmp.ne.s32.totalorder %s26, %s29
      %p38 = scmp.eq.s32.totalorder %s21, 1
      %p39 = por %p37, %p38
      %p40 = scmp.ne.s32.totalorder %s29, %s30
      %p41 = scmp.eq.s32.totalorder %s21, 0
      %p42 = por %p40, %p41
      %p43 = scmp.ne.s32.totalorder %s29, %s30
      %p44 = scmp.eq.s32.totalorder %s22, 1
      %p45 = por %p43, %p44
      %p47 = scmp.ne.s32.totalorder %s30, %s46
      %p48 = scmp.eq.s32.totalorder %s22, 0
      %p49 = por %p47, %p48
      %s51 = sadd.s32 %s50, 1
      %p54 = scmp.eq.s32.totalorder %s16, 1
      %p55 = scmp.ne.s32.totalorder %s50, %s52
      %p56 = scmp.eq.s32.totalorder %s16, 0
      %p57 = por %p55, %p56
      %p58 = scmp.ne.s32.totalorder %s50, %s52
      %p59 = scmp.eq.s32.totalorder %s21, 1
      %p60 = por %p58, %p59
      %p61 = scmp.ne.s32.totalorder %s52, %s53
      %p62 = scmp.eq.s32.totalorder %s21, 0
      %p63 = por %p61, %p62
      %p64 = scmp.ne.s32.totalorder %s52, %s53
      %p65 = scmp.eq.s32.totalorder %s22, 1
      %p66 = por %p64, %p65
      %p68 = scmp.ne.s32.totalorder %s53, %s67
      %p69 = scmp.eq.s32.totalorder %s22, 0
      %p70 = por %p68, %p69
      %s72 = sadd.s32 %s71, 1
      %p75 = scmp.eq.s32.totalorder %s16, 1
      %p76 = scmp.ne.s32.totalorder %s71, %s73
      %p77 = scmp.eq.s32.totalorder %s16, 0
      %p78 = por %p76, %p77
      %p79 = scmp.ne.s32.totalorder %s71, %s73
      %p80 = scmp.eq.s32.totalorder %s21, 1
      %p81 = por %p79, %p80
      %p82 = scmp.ne.s32.totalorder %s73, %s74
      %p83 = scmp.eq.s32.totalorder %s21, 0
      %p84 = por %p82, %p83
      %p85 = scmp.ne.s32.totalorder %s73, %s74
      %p86 = scmp.eq.s32.totalorder %s22, 1
      %p87 = por %p85, %p86
      %p89 = scmp.ne.s32.totalorder %s74, %s88
      %p90 = scmp.eq.s32.totalorder %s22, 0
      %p91 = por %p89, %p90
      %s93 = sadd.s32 %s92, 1
      %p96 = scmp.eq.s32.totalorder %s16, 1
      %p97 = scmp.ne.s32.totalorder %s92, %s94
      %p98 = scmp.eq.s32.totalorder %s16, 0
      %p99 = por %p97, %p98
      %p100 = scmp.ne.s32.totalorder %s92, %s94
      %p101 = scmp.eq.s32.totalorder %s21, 1
      %p102 = por %p100, %p101
      %p103 = scmp.ne.s32.totalorder %s94, %s95
      %p104 = scmp.eq.s32.totalorder %s21, 0
      %p105 = por %p103, %p104
      %p106 = scmp.ne.s32.totalorder %s94, %s95
      %p107 = scmp.eq.s32.totalorder %s22, 1
      %p108 = por %p106, %p107
      %p110 = scmp.ne.s32.totalorder %s95, %s109
      %p111 = scmp.eq.s32.totalorder %s22, 0
      %p112 = por %p110, %p111
      %s114 = sadd.s32 %s113, 1
      %p117 = scmp.eq.s32.totalorder %s16, 1
      %p118 = scmp.ne.s32.totalorder %s113, %s115
      %p119 = scmp.eq.s32.totalorder %s16, 0
      %p120 = por %p118, %p119
      %p121 = scmp.ne.s32.totalorder %s113, %s115
      %p122 = scmp.eq.s32.totalorder %s21, 1
      %p123 = por %p121, %p122
      %p124 = scmp.ne.s32.totalorder %s115, %s116
      %p125 = scmp.eq.s32.totalorder %s21, 0
      %p126 = por %p124, %p125
      %p127 = scmp.ne.s32.totalorder %s115, %s116
      %p128 = scmp.eq.s32.totalorder %s22, 1
      %p129 = por %p127, %p128
      %p131 = scmp.ne.s32.totalorder %s116, %s130
      %p132 = scmp.eq.s32.totalorder %s22, 0
      %p133 = por %p131, %p132
      %s135 = sadd.s32 %s134, 1
      %p138 = scmp.eq.s32.totalorder %s16, 1
      %p139 = scmp.ne.s32.totalorder %s134, %s136
      %p140 = scmp.eq.s32.totalorder %s16, 0
      %p141 = por %p139, %p140
      %p142 = scmp.ne.s32.totalorder %s134, %s136
      %p143 = scmp.eq.s32.totalorder %s21, 1
      %p144 = por %p142, %p143
      %p145 = scmp.ne.s32.totalorder %s136, %s137
      %p146 = scmp.eq.s32.totalorder %s21, 0
      %p147 = por %p145, %p146
      %p148 = scmp.ne.s32.totalorder %s136, %s137
      %p149 = scmp.eq.s32.totalorder %s22, 1
      %p150 = por %p148, %p149
      %p152 = scmp.ne.s32.totalorder %s137, %s151
      %p153 = scmp.eq.s32.totalorder %s22, 0
      %p154 = por %p152, %p153
      %s156 = sadd.s32 %s155, 1
      %p159 = scmp.eq.s32.totalorder %s16, 1
      %p160 = scmp.ne.s32.totalorder %s155, %s157
      %p161 = scmp.eq.s32.totalorder %s16, 0
      %p162 = por %p160, %p161
      %p163 = scmp.ne.s32.totalorder %s155, %s157
      %p164 = scmp.eq.s32.totalorder %s21, 1
      %p165 = por %p163, %p164
      %p166 = scmp.ne.s32.totalorder %s157, %s158
      %p167 = scmp.eq.s32.totalorder %s21, 0
      %p168 = por %p166, %p167
      %p169 = scmp.ne.s32.totalorder %s157, %s158
      %p170 = scmp.eq.s32.totalorder %s22, 1
      %p171 = por %p169, %p170
      %p173 = scmp.ne.s32.totalorder %s158, %s172
      %p174 = scmp.eq.s32.totalorder %s22, 0
      %p175 = por %p173, %p174
      %s176 = ssub.s32 %s16, %s23
      %p177 = scmp.eq.s32.totalorder %s176, 0
      %s179 = sadd.s32 %s178, 1
      %s180 = scalar_select %p177, %s178, %s179
      %p183 = pneg %p177
      %p184 = scmp.eq.s32.totalorder %s16, 1
      %p185 = por %p183, %p184
      %p186 = scmp.ne.s32.totalorder %s178, %s181
      %p187 = scmp.eq.s32.totalorder %s16, 0
      %p188 = por %p186, %p187
      %p189 = scmp.ne.s32.totalorder %s178, %s181
      %p190 = scmp.eq.s32.totalorder %s21, 1
      %p191 = por %p189, %p190
      %p192 = scmp.ne.s32.totalorder %s181, %s182
      %p193 = scmp.eq.s32.totalorder %s21, 0
      %p194 = por %p192, %p193
      %p195 = scmp.ne.s32.totalorder %s181, %s182
      %p196 = scmp.eq.s32.totalorder %s22, 1
      %p197 = por %p195, %p196
      %p199 = scmp.ne.s32.totalorder %s182, %s198
      %p200 = scmp.eq.s32.totalorder %s22, 0
      %p201 = por %p199, %p200
      %p202 = scmp.le.s32.totalorder 1, %s16
      %p203 = scmp.lt.s32.totalorder %s16, 3
      %p204 = pnand %p202, %p203
      %p205 = pneg %p204
      // Predicated region
      $region9: #{tpu_custom_call.1} parent=5 // pred_check
        _
      $region10: #{tpu_custom_call.1} parent=5 // pred_check_branch
        %207 = sbr.rel (%p204) target = $region12
      $region11: #{tpu_custom_call.1} parent=5 // pred_region
        %s208 = ssub.s32 %s16, 1
        // Predicated region
        $region13: #{tpu_custom_call.1} parent=11 // pred_check
          %p209 = pneg %p63
        $region14: #{tpu_custom_call.1} parent=11 // pred_check_branch
          %211 = sbr.rel (%p209) target = $region16
        $region15: #{tpu_custom_call.1} parent=11 // pred_region
          _
        $region16: #{tpu_custom_call.1} parent=11 // pred_fallthru
          _
        // Predicated region
        $region17: #{tpu_custom_call.1} parent=11 // pred_check
          %p212 = pneg %p84
        $region18: #{tpu_custom_call.1} parent=11 // pred_check_branch
          %214 = sbr.rel (%p212) target = $region20
        $region19: #{tpu_custom_call.1} parent=11 // pred_region
          _
        $region20: #{tpu_custom_call.1} parent=11 // pred_fallthru
          _
        // Predicated region
        $region21: #{tpu_custom_call.1} parent=11 // pred_check
          %p215 = pneg %p105
        $region22: #{tpu_custom_call.1} parent=11 // pred_check_branch
          %217 = sbr.rel (%p215) target = $region24
        $region23: #{tpu_custom_call.1} parent=11 // pred_region
          _
        $region24: #{tpu_custom_call.1} parent=11 // pred_fallthru
          _
        // Predicated region
        $region25: #{tpu_custom_call.1} parent=11 // pred_check
          %p218 = pneg %p126
        $region26: #{tpu_custom_call.1} parent=11 // pred_check_branch
          %220 = sbr.rel (%p218) target = $region28
        $region27: #{tpu_custom_call.1} parent=11 // pred_region
          _
        $region28: #{tpu_custom_call.1} parent=11 // pred_fallthru
          _
        // Predicated region
        $region29: #{tpu_custom_call.1} parent=11 // pred_check
          %p221 = pneg %p147
        $region30: #{tpu_custom_call.1} parent=11 // pred_check_branch
          %223 = sbr.rel (%p221) target = $region32
        $region31: #{tpu_custom_call.1} parent=11 // pred_region
          _
        $region32: #{tpu_custom_call.1} parent=11 // pred_fallthru
          _
        // Predicated region
        $region33: #{tpu_custom_call.1} parent=11 // pred_check
          %p224 = pneg %p168
        $region34: #{tpu_custom_call.1} parent=11 // pred_check_branch
          %226 = sbr.rel (%p224) target = $region36
        $region35: #{tpu_custom_call.1} parent=11 // pred_region
          _
        $region36: #{tpu_custom_call.1} parent=11 // pred_fallthru
          _
      $region12: #{tpu_custom_call.1} parent=5 // pred_fallthru
        _
      %p227 = scmp.lt.s32.totalorder %s16, 2
      // Predicated region
      $region37: #{tpu_custom_call.1} parent=5 // pred_check
        %p228 = pneg %p227
      $region38: #{tpu_custom_call.1} parent=5 // pred_check_branch
        %230 = sbr.rel (%p228) target = $region40
      $region39: #{tpu_custom_call.1} parent=5 // pred_region
        // Predicated region
        $region41: #{tpu_custom_call.1} parent=39 // pred_check
          %p231 = pneg %p36
        $region42: #{tpu_custom_call.1} parent=39 // pred_check_branch
          %233 = sbr.rel (%p231) target = $region44
        $region43: #{tpu_custom_call.1} parent=39 // pred_region
          %s234 = smul.u32 2, %s16
          %p235 = scmp.lt.s32.totalorder %s234, 3
          %s236 = scalar_select %p235, %s234, 3
          %s237 = smul.addr %s236, 2
          %s238 = scalar_lea.vmem %s0, %s237
          %s239 = smul.u32 2, %s16
        $region44: #{tpu_custom_call.1} parent=39 // pred_fallthru
          _
      $region40: #{tpu_custom_call.1} parent=5 // pred_fallthru
        _
      %p240 = scmp.le.s32.totalorder 1, %s16
      %p241 = scmp.lt.s32.totalorder %s16, 3
      %p242 = pnand %p240, %p241
      %p243 = pneg %p242
      // Predicated region
      $region45: #{tpu_custom_call.1} parent=5 // pred_check
        _
      $region46: #{tpu_custom_call.1} parent=5 // pred_check_branch
        %245 = sbr.rel (%p242) target = $region48
      $region47: #{tpu_custom_call.1} parent=5 // pred_region
        %s246 = ssub.s32 %s16, 1
        %s247 = smul.u32 2, %s21
        %p248 = scmp.lt.s32.totalorder %s247, 3
        %s249 = scalar_select %p248, %s247, 3
        %s250 = smul.addr %s249, 2
        %s251 = scalar_lea.vmem %s0, %s250
        %p252 = pneg %p42
        %p253 = pneg %p39
        %p254 = pneg %p63
        %p255 = pneg %p60
        %p256 = pneg %p84
        %p257 = pneg %p81
        %p258 = pneg %p105
        %p259 = pneg %p102
        %p260 = pneg %p126
        %p261 = pneg %p123
        %p262 = pneg %p147
        %p263 = pneg %p144
        %p264 = pneg %p168
        %p265 = pneg %p165
        %p266 = pneg %p194
        %p267 = pneg %p191
        %s268 = sand.u32 %s181, 1
        %s269 = scalar_lea.sflag [#allocation3], %s268
        %s270 = sand.u32 %s181, 1
        %s271 = smul.addr %s270, 8
        %s272 = scalar_lea.vmem [#allocation2], %s271
        %s273 = smul.u32 2, %s21
        %p274 = scmp.lt.s32.totalorder %s273, 3
        %s275 = scalar_select %p274, %s273, 3
        %s276 = smul.addr %s275, 2
        %s277 = scalar_lea.vmem %s0, %s276
        %s278 = smul.u32 2, %s21
        %s279 = smul.u32 2, %s21
        %v281 = vld [vmem:[%s277] ss:$2 sm:$0x3]
        %s282 = scalar_lea.vmem %s277, 1
        %v283 = vld [vmem:[%s282] ss:$2 sm:$0x3]
        %v284 = vld [vmem:[%s1] sm:$0xff]
        %v285 = vld [vmem:[%s1 + $0x8] sm:$0xff]
        %v286 = vld [vmem:[%s1 + $0x10] sm:$0xff]
        %v287 = vld [vmem:[%s1 + $0x18] sm:$0xff]
        %v288 = vld [vmem:[%s1 + $0x20] sm:$0xff]
        %v289 = vld [vmem:[%s1 + $0x28] sm:$0xff]
        %v290 = vld [vmem:[%s1 + $0x30] sm:$0xff]
        %v291 = vld [vmem:[%s1 + $0x38] sm:$0xff]
        %293 = vset.pattern.permute.xlu0 0
        %294 = vperm.xlu0 %293, %v284
        %v295 = vpop.permute.xlu0 %294
        %298 = vset.pattern.permute.xlu0 0
        %299 = vperm.xlu0 %298, %v285
        %v300 = vpop.permute.xlu0 %299
        %303 = vset.pattern.permute.xlu0 0
        %304 = vperm.xlu0 %303, %v286
        %v305 = vpop.permute.xlu0 %304
        %308 = vset.pattern.permute.xlu0 0
        %309 = vperm.xlu0 %308, %v287
        %v310 = vpop.permute.xlu0 %309
        %313 = vset.pattern.permute.xlu0 0
        %314 = vperm.xlu0 %313, %v288
        %v315 = vpop.permute.xlu0 %314
        %318 = vset.pattern.permute.xlu0 0
        %319 = vperm.xlu0 %318, %v289
        %v320 = vpop.permute.xlu0 %319
        %323 = vset.pattern.permute.xlu0 0
        %324 = vperm.xlu0 %323, %v290
        %v325 = vpop.permute.xlu0 %324
        %328 = vset.pattern.permute.xlu0 0
        %329 = vperm.xlu0 %328, %v291
        %v330 = vpop.permute.xlu0 %329
        %v333 = vlaneseq
        %v334 = vshrl.u32 %v333, 7
        %v335 = vsub.s32 0, %v334
        %v336 = vrot.slane %v281, %v335
        %v337 = vlaneseq
        %v338 = vshrl.u32 %v337, 7
        %v339 = vsub.s32 1, %v338
        %v340 = vrot.slane %v281, %v339
        %v343 = vmul.f32 %v295, %v336
        %v344 = vmul.f32 %v295, %v340
        %v345 = vmul.f32 %v300, %v336
        %v346 = vmul.f32 %v300, %v340
        %v347 = vmul.f32 %v305, %v336
        %v348 = vmul.f32 %v305, %v340
        %v349 = vmul.f32 %v310, %v336
        %v350 = vmul.f32 %v310, %v340
        %v351 = vmul.f32 %v315, %v336
        %v352 = vmul.f32 %v315, %v340
        %v353 = vmul.f32 %v320, %v336
        %v354 = vmul.f32 %v320, %v340
        %v355 = vmul.f32 %v325, %v336
        %v356 = vmul.f32 %v325, %v340
        %v357 = vmul.f32 %v330, %v336
        %v358 = vmul.f32 %v330, %v340
        %359 = vset.pattern.permute.xlu0 1
        %360 = vperm.xlu0 %359, %v284
        %v361 = vpop.permute.xlu0 %360
        %363 = vset.pattern.permute.xlu0 1
        %364 = vperm.xlu0 %363, %v285
        %v365 = vpop.permute.xlu0 %364
        %367 = vset.pattern.permute.xlu0 1
        %368 = vperm.xlu0 %367, %v286
        %v369 = vpop.permute.xlu0 %368
        %371 = vset.pattern.permute.xlu0 1
        %372 = vperm.xlu0 %371, %v287
        %v373 = vpop.permute.xlu0 %372
        %375 = vset.pattern.permute.xlu0 1
        %376 = vperm.xlu0 %375, %v288
        %v377 = vpop.permute.xlu0 %376
        %379 = vset.pattern.permute.xlu0 1
        %380 = vperm.xlu0 %379, %v289
        %v381 = vpop.permute.xlu0 %380
        %383 = vset.pattern.permute.xlu0 1
        %384 = vperm.xlu0 %383, %v290
        %v385 = vpop.permute.xlu0 %384
        %387 = vset.pattern.permute.xlu0 1
        %388 = vperm.xlu0 %387, %v291
        %v389 = vpop.permute.xlu0 %388
        %v392 = vlaneseq
        %v393 = vshrl.u32 %v392, 7
        %v394 = vsub.s32 0, %v393
        %v395 = vrot.slane %v283, %v394
        %v396 = vlaneseq
        %v397 = vshrl.u32 %v396, 7
        %v398 = vsub.s32 1, %v397
        %v399 = vrot.slane %v283, %v398
        %v402 = vmul.f32 %v361, %v395
        %v403 = vmul.f32 %v361, %v399
        %v404 = vmul.f32 %v365, %v395
        %v405 = vmul.f32 %v365, %v399
        %v406 = vmul.f32 %v369, %v395
        %v407 = vmul.f32 %v369, %v399
        %v408 = vmul.f32 %v373, %v395
        %v409 = vmul.f32 %v373, %v399
        %v410 = vmul.f32 %v377, %v395
        %v411 = vmul.f32 %v377, %v399
        %v412 = vmul.f32 %v381, %v395
        %v413 = vmul.f32 %v381, %v399
        %v414 = vmul.f32 %v385, %v395
        %v415 = vmul.f32 %v385, %v399
        %v416 = vmul.f32 %v389, %v395
        %v417 = vmul.f32 %v389, %v399
        %v418 = vadd.f32 %v343, %v402
        %v419 = vadd.f32 %v344, %v403
        %v420 = vadd.f32 %v345, %v404
        %v421 = vadd.f32 %v346, %v405
        %v422 = vadd.f32 %v347, %v406
        %v423 = vadd.f32 %v348, %v407
        %v424 = vadd.f32 %v349, %v408
        %v425 = vadd.f32 %v350, %v409
        %v426 = vadd.f32 %v351, %v410
        %v427 = vadd.f32 %v352, %v411
        %v428 = vadd.f32 %v353, %v412
        %v429 = vadd.f32 %v354, %v413
        %v430 = vadd.f32 %v355, %v414
        %v431 = vadd.f32 %v356, %v415
        %v432 = vadd.f32 %v357, %v416
        %v433 = vadd.f32 %v358, %v417
        %v434 = vld [vmem:[%s2] sm:$0xff]
        %v435 = vld [vmem:[%s2 + $0x8] sm:$0xff]
        %v436 = vld [vmem:[%s2 + $0x10] sm:$0xff]
        %v437 = vld [vmem:[%s2 + $0x18] sm:$0xff]
        %v438 = vld [vmem:[%s2 + $0x20] sm:$0xff]
        %v439 = vld [vmem:[%s2 + $0x28] sm:$0xff]
        %v440 = vld [vmem:[%s2 + $0x30] sm:$0xff]
        %v441 = vld [vmem:[%s2 + $0x38] sm:$0xff]
        %443 = vset.pattern.permute.xlu0 0
        %444 = vperm.xlu0 %443, %v434
        %v445 = vpop.permute.xlu0 %444
        %448 = vset.pattern.permute.xlu0 0
        %449 = vperm.xlu0 %448, %v435
        %v450 = vpop.permute.xlu0 %449
        %453 = vset.pattern.permute.xlu0 0
        %454 = vperm.xlu0 %453, %v436
        %v455 = vpop.permute.xlu0 %454
        %458 = vset.pattern.permute.xlu0 0
        %459 = vperm.xlu0 %458, %v437
        %v460 = vpop.permute.xlu0 %459
        %463 = vset.pattern.permute.xlu0 0
        %464 = vperm.xlu0 %463, %v438
        %v465 = vpop.permute.xlu0 %464
        %468 = vset.pattern.permute.xlu0 0
        %469 = vperm.xlu0 %468, %v439
        %v470 = vpop.permute.xlu0 %469
        %473 = vset.pattern.permute.xlu0 0
        %474 = vperm.xlu0 %473, %v440
        %v475 = vpop.permute.xlu0 %474
        %478 = vset.pattern.permute.xlu0 0
        %479 = vperm.xlu0 %478, %v441
        %v480 = vpop.permute.xlu0 %479
        %v482 = vadd.f32 %v418, %v445
        %v483 = vadd.f32 %v419, %v445
        %v484 = vadd.f32 %v420, %v450
        %v485 = vadd.f32 %v421, %v450
        %v486 = vadd.f32 %v422, %v455
        %v487 = vadd.f32 %v423, %v455
        %v488 = vadd.f32 %v424, %v460
        %v489 = vadd.f32 %v425, %v460
        %v490 = vadd.f32 %v426, %v465
        %v491 = vadd.f32 %v427, %v465
        %v492 = vadd.f32 %v428, %v470
        %v493 = vadd.f32 %v429, %v470
        %v494 = vadd.f32 %v430, %v475
        %v495 = vadd.f32 %v431, %v475
        %v496 = vadd.f32 %v432, %v480
        %v497 = vadd.f32 %v433, %v480
        %v498 = vtanh.pop %v482
        %v499 = vtanh.pop %v483
        %v500 = vtanh.pop %v484
        %v501 = vtanh.pop %v485
        %v502 = vtanh.pop %v486
        %v503 = vtanh.pop %v487
        %v504 = vtanh.pop %v488
        %v505 = vtanh.pop %v489
        %v506 = vtanh.pop %v490
        %v507 = vtanh.pop %v491
        %v508 = vtanh.pop %v492
        %v509 = vtanh.pop %v493
        %v510 = vtanh.pop %v494
        %v511 = vtanh.pop %v495
        %v512 = vtanh.pop %v496
        %v513 = vtanh.pop %v497
        %v514 = vpack.c.bf16 %v500, %v498
        %v515 = vpack.c.bf16 %v501, %v499
        %v516 = vpack.c.bf16 %v504, %v502
        %v517 = vpack.c.bf16 %v505, %v503
        %v518 = vpack.c.bf16 %v508, %v506
        %v519 = vpack.c.bf16 %v509, %v507
        %v520 = vpack.c.bf16 %v512, %v510
        %v521 = vpack.c.bf16 %v513, %v511
        %v522 = vld [vmem:[%s3] sm:$0xf]
        %v523 = vld [vmem:[%s3 + $0x4] sm:$0xf]
        %v524 = vld [vmem:[%s3 + $0x8] sm:$0xf]
        %v525 = vld [vmem:[%s3 + $0xc] sm:$0xf]
        %v526 = vld [vmem:[%s3 + $0x10] sm:$0xf]
        %v527 = vld [vmem:[%s3 + $0x14] sm:$0xf]
        %v528 = vld [vmem:[%s3 + $0x18] sm:$0xf]
        %v529 = vld [vmem:[%s3 + $0x1c] sm:$0xf]
        %v530 = vld [vmem:[%s4] sm:$0xff]
        %v531 = vld [vmem:[%s4 + $0x8] sm:$0xff]
        %v532 = vld [vmem:[%s4 + $0x10] sm:$0xff]
        %v533 = vld [vmem:[%s4 + $0x18] sm:$0xff]
        %v534 = vld [vmem:[%s4 + $0x20] sm:$0xff]
        %v535 = vld [vmem:[%s4 + $0x28] sm:$0xff]
        %v536 = vld [vmem:[%s4 + $0x30] sm:$0xff]
        %v537 = vld [vmem:[%s4 + $0x38] sm:$0xff]
        %539 = vset.pattern.permute.xlu0 0
        %540 = vperm.xlu0 %539, %v530
        %v541 = vpop.permute.xlu0 %540
        %544 = vset.pattern.permute.xlu0 0
        %545 = vperm.xlu0 %544, %v531
        %v546 = vpop.permute.xlu0 %545
        %549 = vset.pattern.permute.xlu0 0
        %550 = vperm.xlu0 %549, %v532
        %v551 = vpop.permute.xlu0 %550
        %554 = vset.pattern.permute.xlu0 0
        %555 = vperm.xlu0 %554, %v533
        %v556 = vpop.permute.xlu0 %555
        %559 = vset.pattern.permute.xlu0 0
        %560 = vperm.xlu0 %559, %v534
        %v561 = vpop.permute.xlu0 %560
        %564 = vset.pattern.permute.xlu0 0
        %565 = vperm.xlu0 %564, %v535
        %v566 = vpop.permute.xlu0 %565
        %569 = vset.pattern.permute.xlu0 0
        %570 = vperm.xlu0 %569, %v536
        %v571 = vpop.permute.xlu0 %570
        %574 = vset.pattern.permute.xlu0 0
        %575 = vperm.xlu0 %574, %v537
        %v576 = vpop.permute.xlu0 %575
        %v586 = vunpack.c.l.b16 %v522
        %v587 = vunpack.c.l.b16 %v523
        %v588 = vunpack.c.l.b16 %v524
        %v589 = vunpack.c.l.b16 %v525
        %v590 = vunpack.c.l.b16 %v526
        %v591 = vunpack.c.l.b16 %v527
        %v592 = vunpack.c.l.b16 %v528
        %v593 = vunpack.c.l.b16 %v529
        %v594 = vpack.c.b16 %v587, %v586
        %v595 = vpack.c.b16 %v589, %v588
        %v596 = vpack.c.b16 %v591, %v590
        %v597 = vpack.c.b16 %v593, %v592
        %vm598 = vcmask 523264
        %v600 = vsel %vm598, %v594, 0
        %v603 = vsel %vm598, %v595, 0
        %v606 = vsel %vm598, %v596, 0
        %v609 = vsel %vm598, %v597, 0
        %611 = vmatprep.subr.bf16.mxu0 %v515
        %612 = vmatpush1.bf16.msra.mxu0 %v514
        %613 = vmatprep.subr.bf16.mxu0 %v517
        %614 = vmatpush1.bf16.msra.mxu0 %v516
        %615 = vmatprep.subr.bf16.mxu0 %v519
        %616 = vmatpush1.bf16.msra.mxu0 %v518
        %617 = vmatprep.subr.bf16.mxu0 %v521
        %618 = vmatpush1.bf16.msra.mxu0 %v520
        %619 = vmatprep.subr.bf16.mxu0 0
        %620 = vmatpush1.bf16.msra.mxu0 0
        %621 = vmatprep.subr.bf16.mxu0 0
        %622 = vmatpush1.bf16.msra.mxu0 0
        %623 = vmatprep.subr.bf16.mxu0 0
        %624 = vmatpush1.bf16.msra.mxu0 0
        %625 = vmatprep.subr.bf16.mxu0 0
        %626 = vmatpush1.bf16.msra.mxu0 0
        %627 = vmatprep.subr.bf16.mxu0 0
        %628 = vmatpush1.bf16.msra.mxu0 0
        %629 = vmatprep.subr.bf16.mxu0 0
        %630 = vmatpush1.bf16.msra.mxu0 0
        %631 = vmatprep.subr.bf16.mxu0 0
        %632 = vmatpush1.bf16.msra.mxu0 0
        %633 = vmatprep.subr.bf16.mxu0 0
        %634 = vmatpush1.bf16.msra.mxu0 0
        %635 = vmatprep.subr.bf16.mxu0 0
        %636 = vmatpush1.bf16.msra.mxu0 0
        %637 = vmatprep.subr.bf16.mxu0 0
        %638 = vmatpush1.bf16.msra.mxu0 0
        %639 = vmatprep.subr.bf16.mxu0 0
        %640 = vmatpush1.bf16.msra.mxu0 0
        %641 = vmatprep.subr.bf16.mxu0 0
        %642 = vmatpush1.bf16.msra.mxu0 0
        %643 = vmatprep.mubr.bf16.mxu0 0
        %644 = vmatmul.mubr.bf16.gmra.mrb[0].mxu0 %v600
        %v645 = vpop.f32.mrb[0].mxu0
        %v646 = vadd.f32 %v541, %v645
        %v647 = vpop.f32.mrb[0].mxu0
        %v648 = vadd.f32 %v541, %v647
        %v649 = vpop.f32.mrb[0].mxu0
        %v650 = vadd.f32 %v546, %v649
        %v651 = vpop.f32.mrb[0].mxu0
        %v652 = vadd.f32 %v546, %v651
        %653 = vmatprep.mubr.bf16.mxu0 0
        %654 = vmatmul.mubr.bf16.gmra.mrb[0].mxu0 %v603
        %v655 = vpop.f32.mrb[0].mxu0
        %v656 = vadd.f32 %v551, %v655
        %v657 = vpop.f32.mrb[0].mxu0
        %v658 = vadd.f32 %v551, %v657
        %v659 = vpop.f32.mrb[0].mxu0
        %v660 = vadd.f32 %v556, %v659
        %v661 = vpop.f32.mrb[0].mxu0
        %v662 = vadd.f32 %v556, %v661
        %663 = vmatprep.mubr.bf16.mxu0 0
        %664 = vmatmul.mubr.bf16.gmra.mrb[0].mxu0 %v606
        %v665 = vpop.f32.mrb[0].mxu0
        %v666 = vadd.f32 %v561, %v665
        %v667 = vpop.f32.mrb[0].mxu0
        %v668 = vadd.f32 %v561, %v667
        %v669 = vpop.f32.mrb[0].mxu0
        %v670 = vadd.f32 %v566, %v669
        %v671 = vpop.f32.mrb[0].mxu0
        %v672 = vadd.f32 %v566, %v671
        %673 = vmatprep.mubr.bf16.mxu0 0
        %674 = vmatmul.mubr.bf16.gmra.mrb[0].mxu0 %v609
        %v675 = vpop.f32.mrb[0].mxu0
        %v676 = vadd.f32 %v571, %v675
        %v677 = vpop.f32.mrb[0].mxu0
        %v678 = vadd.f32 %v571, %v677
        %v679 = vpop.f32.mrb[0].mxu0
        %v680 = vadd.f32 %v576, %v679
        %v681 = vpop.f32.mrb[0].mxu0
        %v682 = vadd.f32 %v576, %v681
        %683 = vdwg.mxu0
        %v684 = vtanh.pop %v646
        %v685 = vtanh.pop %v648
        %v686 = vtanh.pop %v650
        %v687 = vtanh.pop %v652
        %v688 = vtanh.pop %v656
        %v689 = vtanh.pop %v658
        %v690 = vtanh.pop %v660
        %v691 = vtanh.pop %v662
        %v692 = vtanh.pop %v666
        %v693 = vtanh.pop %v668
        %v694 = vtanh.pop %v670
        %v695 = vtanh.pop %v672
        %v696 = vtanh.pop %v676
        %v697 = vtanh.pop %v678
        %v698 = vtanh.pop %v680
        %v699 = vtanh.pop %v682
        %v700 = vpack.c.bf16 %v686, %v684
        %v701 = vpack.c.bf16 %v687, %v685
        %v702 = vpack.c.bf16 %v690, %v688
        %v703 = vpack.c.bf16 %v691, %v689
        %v704 = vpack.c.bf16 %v694, %v692
        %v705 = vpack.c.bf16 %v695, %v693
        %v706 = vpack.c.bf16 %v698, %v696
        %v707 = vpack.c.bf16 %v699, %v697
        %v708 = vld [vmem:[%s5] sm:$0x3]
        %v709 = vld [vmem:[%s6] sm:$0x7]
        %711 = vset.pattern.permute.xlu0 0
        %712 = vperm.xlu0 %711, %v709
        %v713 = vpop.permute.xlu0 %712
        %v716 = vsel %vm598, %v708, 0
        %718 = vmatprep.subr.bf16.mxu0 %v701
        %719 = vmatpush1.bf16.msra.mxu0 %v700
        %720 = vmatprep.subr.bf16.mxu0 %v703
        %721 = vmatpush1.bf16.msra.mxu0 %v702
        %722 = vmatprep.subr.bf16.mxu0 %v705
        %723 = vmatpush1.bf16.msra.mxu0 %v704
        %724 = vmatprep.subr.bf16.mxu0 %v707
        %725 = vmatpush1.bf16.msra.mxu0 %v706
        %726 = vmatprep.subr.bf16.mxu0 0
        %727 = vmatpush1.bf16.msra.mxu0 0
        %728 = vmatprep.subr.bf16.mxu0 0
        %729 = vmatpush1.bf16.msra.mxu0 0
        %730 = vmatprep.subr.bf16.mxu0 0
        %731 = vmatpush1.bf16.msra.mxu0 0
        %732 = vmatprep.subr.bf16.mxu0 0
        %733 = vmatpush1.bf16.msra.mxu0 0
        %734 = vmatprep.subr.bf16.mxu0 0
        %735 = vmatpush1.bf16.msra.mxu0 0
        %736 = vmatprep.subr.bf16.mxu0 0
        %737 = vmatpush1.bf16.msra.mxu0 0
        %738 = vmatprep.subr.bf16.mxu0 0
        %739 = vmatpush1.bf16.msra.mxu0 0
        %740 = vmatprep.subr.bf16.mxu0 0
        %741 = vmatpush1.bf16.msra.mxu0 0
        %742 = vmatprep.subr.bf16.mxu0 0
        %743 = vmatpush1.bf16.msra.mxu0 0
        %744 = vmatprep.subr.bf16.mxu0 0
        %745 = vmatpush1.bf16.msra.mxu0 0
        %746 = vmatprep.subr.bf16.mxu0 0
        %747 = vmatpush1.bf16.msra.mxu0 0
        %748 = vmatprep.subr.bf16.mxu0 0
        %749 = vmatpush1.bf16.msra.mxu0 0
        %750 = vmatprep.mubr.bf16.mxu0 0
        %751 = vmatmul.mubr.bf16.gmra.mrb[0].mxu0 %v716
        %v752 = vpop.f32.mrb[0].mxu0
        %v753 = vadd.f32 %v713, %v752
        %v754 = vpop.f32.mrb[0].mxu0
        %v755 = vadd.f32 %v713, %v754
        %v756 = vpop.f32.mrb[0].mxu0
        %v757 = vpop.f32.mrb[0].mxu0
        %758 = vdwg.mxu0
        %v761 = vcombine.low %v753, %v755
        %763 = vst [vmem:[%s272] sm:$0x77] %v761
        %s764 = sand.u32 %s181, 1
        %s765 = scalar_lea.sflag [#allocation3], %s764
        %s766 = sand.u32 %s181, 1
        %s767 = smul.addr %s766, 8
        %s768 = scalar_lea.vmem [#allocation2], %s767
        // Predicated region
        $region49: #{tpu_custom_call.1} parent=47 // pred_check
          %p769 = pneg %p191
        $region50: #{tpu_custom_call.1} parent=47 // pred_check_branch
          %771 = sbr.rel (%p769) target = $region52
        $region51: #{tpu_custom_call.1} parent=47 // pred_region
          %s772 = smul.u32 2, %s21
          %s774 = ssub.s32 128, 128
          %775 = vsyncadd %s765, %s774
          %s776 = smul.addr %s772, 64
          %s777 = scalar_lea.hbm %s7, %s776
          %s779 = sshll.u32 %s768, 4
          %s780 = int_to_ptr.vmem [resolvable:$true] %s779
          %782 = dma.vmem_to_hbm [thread:$0]  %s780, 128, %s777, %s765
        $region52: #{tpu_custom_call.1} parent=47 // pred_fallthru
          _
      $region48: #{tpu_custom_call.1} parent=5 // pred_fallthru
        _
      %p783 = scmp.le.s32.totalorder 2, %s16
      // Predicated region
      $region53: #{tpu_custom_call.1} parent=5 // pred_check
        %p784 = pneg %p783
      $region54: #{tpu_custom_call.1} parent=5 // pred_check_branch
        %786 = sbr.rel (%p784) target = $region56
      $region55: #{tpu_custom_call.1} parent=5 // pred_region
        %s787 = ssub.s32 %s16, 2
        // Predicated region
        $region57: #{tpu_custom_call.1} parent=55 // pred_check
          %p788 = pneg %p197
        $region58: #{tpu_custom_call.1} parent=55 // pred_check_branch
          %790 = sbr.rel (%p788) target = $region60
        $region59: #{tpu_custom_call.1} parent=55 // pred_region
          %s791 = sand.u32 %s182, 1
          %s792 = scalar_lea.sflag [#allocation3], %s791
          %s793 = sand.u32 %s182, 1
          %s794 = smul.addr %s793, 8
          %s795 = scalar_lea.vmem [#allocation2], %s794
          %796 = dma.done %s792, 128
        $region60: #{tpu_custom_call.1} parent=55 // pred_fallthru
          _
      $region56: #{tpu_custom_call.1} parent=5 // pred_fallthru
        _
    $region6: #{tpu_custom_call.1} parent=1 // loop_footer
      %s20 = sadd.s32 1, %s16
    $region7: #{tpu_custom_call.1} parent=1 // loop_footer_branch
      %15 = sbr.rel target = $region3
    $region8: #{tpu_custom_call.1} parent=1 // loop_exit
      _
    %797 = vsyncpa [#allocation3], 1
    %s798 = scalar_lea.sflag [#allocation3], 1
    %799 = vsyncpa %s798, 1

</llo_original>
